<compile_context>
chip_gen: v5e
topology: v5e:2x2
jax: 0.10.0
libtpu: 0.0.40
codegen_flags: <defaults>
</compile_context>

<pallas_src>
import numpy as np
import jax
import jax.numpy as jnp
from jax.experimental import pallas as pl
from jax.experimental.pallas import tpu as pltpu


def _log_sigmoid(x):
    # Numerically stable log(sigmoid(x)) = min(x, 0) - log1p(exp(-|x|)).
    return jnp.minimum(x, 0.0) - jnp.log1p(jnp.exp(-jnp.abs(x)))


def _forest_kernel(x_ref, w_ref, rpos_ref, rneg_ref, pi_ref, probs_ref, prob_ref):
    # x_ref:     [TB, F]        batch tile, features on the lane axis
    # w_ref:     [F, T*U]       all trees' one-hot feature masks, lane-concatenated
    # rpos_ref:  [T*U, T*L]     0/1 table: leaf path takes d        at this split node
    # rneg_ref:  [T*U, T*L]     0/1 table: leaf path takes (1 - d)  at this split node
    # pi_ref:    [T*L, T*C]     block-diagonal leaf -> class distribution
    # probs_ref: [TB, T*L]      routing probabilities, lane-dense slab
    # prob_ref:  [TB, T*C]      per-tree class probabilities, lane-dense slab
    x = x_ref[...]
    feats = jnp.dot(x, w_ref[...], preferred_element_type=jnp.float32)       # [TB, T*U]

    # Log-domain routing product: one matmul per sign instead of a depth-loop.
    logmu = (jnp.dot(_log_sigmoid(feats), rpos_ref[...],
                     preferred_element_type=jnp.float32) +
             jnp.dot(_log_sigmoid(-feats), rneg_ref[...],
                     preferred_element_type=jnp.float32))                     # [TB, T*L]
    mu = jnp.exp(logmu)                                                       # [TB, T*L]

    probs_ref[...] = mu.astype(probs_ref.dtype)
    prob_ref[...] = jnp.dot(mu, pi_ref[...],
                            preferred_element_type=jnp.float32).astype(prob_ref.dtype)


def _routing_tables(tree_depth: int, n_tree: int):
    """Static 0/1 path-membership tables, block-diagonal over trees.

    Column (t*L + l) of R_pos / R_neg marks which split nodes of tree t lie on
    leaf l's root-to-leaf path and whether the path takes d (R_pos) or 1 - d
    (R_neg) there.  Row index is (t*U + node) matching the feats layout.
    """
    D = tree_depth - 1
    L = 2 ** D
    U = L - 1
    TU, TL = n_tree * U, n_tree * L
    r_pos = np.zeros((TU, TL), np.float32)
    r_neg = np.zeros((TU, TL), np.float32)
    for t in range(n_tree):
        for l in range(L):
            for j in range(D):
                node = (2 ** j - 1) + (l >> (D - j))   # BFS split-node index at layer j
                bit = (l >> (D - 1 - j)) & 1           # 0 -> take d, 1 -> take (1 - d)
                if bit == 0:
                    r_pos[t * U + node, t * L + l] = 1.0
                else:
                    r_neg[t * U + node, t * L + l] = 1.0
    return jnp.asarray(r_pos), jnp.asarray(r_neg)


def forest_forward(x, feature_masks, pi, tree_depth):
    """x: [B, F] f32; feature_masks: [T, F, U] f32; pi: [T, L, C] f32.
    Returns (prob [B, T, C], probs [B, L, T]) matching the PyTorch Forest."""
    B, F = x.shape
    T, _, U = feature_masks.shape
    L = 2 ** (tree_depth - 1)
    C = pi.shape[-1]
    assert U == L - 1

    # Lane-concatenate per-tree params so the whole forest is one invocation.
    w = jnp.transpose(feature_masks, (1, 0, 2)).reshape(F, T * U)            # [F, T*U]
    r_pos, r_neg = _routing_tables(tree_depth, T)                            # [T*U, T*L] x2
    pi_blk = jnp.einsum('tlc,ts->tlsc', pi,
                        jnp.eye(T, dtype=pi.dtype)).reshape(T * L, T * C)    # block-diag

    # Block the batch only when it is large; everything here is KiB-scale.
    TB = B if B <= 512 else 512
    grid = (pl.cdiv(B, TB),)

    probs_flat, prob_flat = pl.pallas_call(
        _forest_kernel,
        out_shape=(
            jax.ShapeDtypeStruct((B, T * L), jnp.float32),
            jax.ShapeDtypeStruct((B, T * C), jnp.float32),
        ),
        grid_spec=pltpu.PrefetchScalarGridSpec(
            num_scalar_prefetch=0,
            grid=grid,
            in_specs=[
                pl.BlockSpec((TB, F), lambda b: (b, 0)),
                pl.BlockSpec((F, T * U), lambda b: (0, 0)),
                pl.BlockSpec((T * U, T * L), lambda b: (0, 0)),
                pl.BlockSpec((T * U, T * L), lambda b: (0, 0)),
                pl.BlockSpec((T * L, T * C), lambda b: (0, 0)),
            ],
            out_specs=[
                pl.BlockSpec((TB, T * L), lambda b: (b, 0)),
                pl.BlockSpec((TB, T * C), lambda b: (b, 0)),
            ],
        ),
        compiler_params=pltpu.CompilerParams(
            dimension_semantics=("parallel",)),
    )(x, w, r_pos, r_neg, pi_blk)

    probs = probs_flat.reshape(B, T, L).transpose(0, 2, 1)   # [B, L, T]  (tiny permute)
    prob = prob_flat.reshape(B, T, C)                        # [B, T, C]  (free reshape)
    return prob, probs


# ---------------- pure-JAX reference (mirrors the PyTorch code) ----------------
def _tree_ref(x, mask, depth):
    d = jax.nn.sigmoid(x @ mask)
    dec = jnp.stack([d, 1.0 - d], axis=2)          # [B, U, 2]
    B = x.shape[0]
    mu = jnp.ones((B, 1, 1), jnp.float32)
    begin, end = 0, 1
    for nl in range(depth - 1):
        mu = jnp.repeat(mu.reshape(B, -1, 1), 2, axis=2)
        mu = mu * dec[:, begin:end, :]
        begin = end
        end = begin + 2 ** (nl + 1)
    return mu.reshape(B, -1)                       # [B, L]


def _forest_ref(x, feature_masks, pi, depth):
    mus = [_tree_ref(x, feature_masks[t], depth) for t in range(feature_masks.shape[0])]
    probs = jnp.stack(mus, axis=2)                 # [B, L, T]
    prob = jnp.einsum('blt,tlc->btc', probs, pi)   # [B, T, C]
    return prob, probs


if __name__ == "__main__":
    # Forest(n_tree=4, tree_depth=4, n_in_feature=32, num_classes=2, iters=20)
    n_tree, tree_depth, n_in_feature = 4, 4, 32
    task_num = 2                                   # Pi default task_num
    batch = 8
    n_leaf = 2 ** (tree_depth - 1)
    n_used = n_leaf - 1

    key = jax.random.PRNGKey(0)
    kx, kpi, kperm = jax.random.split(key, 3)

    x = jax.random.normal(kx, (batch, n_in_feature), dtype=jnp.float32)

    # Per-tree feature_mask: one-hot selection of n_used distinct input features.
    masks = []
    eye = jnp.eye(n_in_feature, dtype=jnp.float32)
    for t in range(n_tree):
        perm = jax.random.permutation(jax.random.fold_in(kperm, t), n_in_feature)
        masks.append(eye[perm[:n_used]].T)         # [F, U]
    feature_masks = jnp.stack(masks, axis=0)       # [T, F, U]

    # Pi mean (squeezed): [T, L, C], uniform in [0, 1) like np.random.rand.
    pi = jax.random.uniform(kpi, (n_tree, n_leaf, task_num), dtype=jnp.float32)

    prob, probs = forest_forward(x, feature_masks, pi, tree_depth)
    jax.block_until_ready((prob, probs))

    prob_ref, probs_ref = _forest_ref(x, feature_masks, pi, tree_depth)
    assert jnp.allclose(prob, prob_ref, rtol=1e-5, atol=1e-5)
    assert jnp.allclose(probs, probs_ref, rtol=1e-5, atol=1e-5)

    print("KERNEL_OK")
</pallas_src>

<mosaic_0001>
module attributes {stable_mosaic.version = 11 : i64} {
  func.func @_forest_kernel(%arg0: i32, %arg1: memref<8x32xf32, #tpu.memory_space<vmem>>, %arg2: memref<32x28xf32, #tpu.memory_space<vmem>>, %arg3: memref<28x32xf32, #tpu.memory_space<vmem>>, %arg4: memref<28x32xf32, #tpu.memory_space<vmem>>, %arg5: memref<32x8xf32, #tpu.memory_space<vmem>>, %arg6: memref<8x32xf32, #tpu.memory_space<vmem>>, %arg7: memref<8x8xf32, #tpu.memory_space<vmem>>) attributes {dimension_semantics = [#tpu.dimension_semantics<parallel>], iteration_bounds = array<i64: 1>, scalar_prefetch = 0 : i64, scratch_operands = 0 : i64, tpu.core_type = #tpu.core_type<tc>, window_params = [{transform_indices = @transform_0, window_bounds = array<i64: 8, 32>}, {pipeline_mode = #tpu.pipeline_mode<synchronous>, transform_indices = @transform_1, window_bounds = array<i64: 32, 28>}, {pipeline_mode = #tpu.pipeline_mode<synchronous>, transform_indices = @transform_2, window_bounds = array<i64: 28, 32>}, {pipeline_mode = #tpu.pipeline_mode<synchronous>, transform_indices = @transform_3, window_bounds = array<i64: 28, 32>}, {pipeline_mode = #tpu.pipeline_mode<synchronous>, transform_indices = @transform_4, window_bounds = array<i64: 32, 8>}, {transform_indices = @transform_5, window_bounds = array<i64: 8, 32>}, {transform_indices = @transform_6, window_bounds = array<i64: 8, 8>}]} {
    %c0 = arith.constant 0 : index
    %c0_0 = arith.constant 0 : index
    %0 = vector.load %arg1[%c0, %c0_0] : memref<8x32xf32, #tpu.memory_space<vmem>>, vector<8x32xf32>
    %c0_1 = arith.constant 0 : index
    %c0_2 = arith.constant 0 : index
    %1 = vector.load %arg2[%c0_1, %c0_2] : memref<32x28xf32, #tpu.memory_space<vmem>>, vector<32x28xf32>
    %cst = arith.constant dense<0.000000e+00> : vector<8x28xf32>
    %2 = tpu.matmul %0, %1, %cst {dimension_numbers = #tpu.dot_dimension_numbers<[1], [0], [0], [1], [0, 0, 1, 1], [], []>} : vector<8x32xf32>, vector<32x28xf32>, vector<8x28xf32> -> vector<8x28xf32>
    %cst_3 = arith.constant 0.000000e+00 : f32
    %3 = vector.broadcast %cst_3 : f32 to vector<8x28xf32>
    %4 = arith.minimumf %2, %3 : vector<8x28xf32>
    %5 = math.absf %2 : vector<8x28xf32>
    %cst_4 = arith.constant 0.000000e+00 : f32
    %6 = vector.broadcast %cst_4 : f32 to vector<8x28xf32>
    %7 = arith.subf %6, %5 : vector<8x28xf32>
    %8 = math.exp %7 : vector<8x28xf32>
    %9 = math.log1p %8 : vector<8x28xf32>
    %10 = arith.subf %4, %9 : vector<8x28xf32>
    %c0_5 = arith.constant 0 : index
    %c0_6 = arith.constant 0 : index
    %11 = vector.load %arg3[%c0_5, %c0_6] : memref<28x32xf32, #tpu.memory_space<vmem>>, vector<28x32xf32>
    %cst_7 = arith.constant dense<0.000000e+00> : vector<8x32xf32>
    %12 = tpu.matmul %10, %11, %cst_7 {dimension_numbers = #tpu.dot_dimension_numbers<[1], [0], [0], [1], [0, 0, 1, 1], [], []>} : vector<8x28xf32>, vector<28x32xf32>, vector<8x32xf32> -> vector<8x32xf32>
    %cst_8 = arith.constant 0.000000e+00 : f32
    %13 = vector.broadcast %cst_8 : f32 to vector<8x28xf32>
    %14 = arith.subf %13, %2 : vector<8x28xf32>
    %cst_9 = arith.constant 0.000000e+00 : f32
    %15 = vector.broadcast %cst_9 : f32 to vector<8x28xf32>
    %16 = arith.minimumf %14, %15 : vector<8x28xf32>
    %17 = math.absf %14 : vector<8x28xf32>
    %cst_10 = arith.constant 0.000000e+00 : f32
    %18 = vector.broadcast %cst_10 : f32 to vector<8x28xf32>
    %19 = arith.subf %18, %17 : vector<8x28xf32>
    %20 = math.exp %19 : vector<8x28xf32>
    %21 = math.log1p %20 : vector<8x28xf32>
    %22 = arith.subf %16, %21 : vector<8x28xf32>
    %c0_11 = arith.constant 0 : index
    %c0_12 = arith.constant 0 : index
    %23 = vector.load %arg4[%c0_11, %c0_12] : memref<28x32xf32, #tpu.memory_space<vmem>>, vector<28x32xf32>
    %cst_13 = arith.constant dense<0.000000e+00> : vector<8x32xf32>
    %24 = tpu.matmul %22, %23, %cst_13 {dimension_numbers = #tpu.dot_dimension_numbers<[1], [0], [0], [1], [0, 0, 1, 1], [], []>} : vector<8x28xf32>, vector<28x32xf32>, vector<8x32xf32> -> vector<8x32xf32>
    %25 = arith.addf %12, %24 : vector<8x32xf32>
    %26 = math.exp %25 : vector<8x32xf32>
    %c0_14 = arith.constant 0 : index
    %c0_15 = arith.constant 0 : index
    %27 = vector.load %arg6[%c0_14, %c0_15] : memref<8x32xf32, #tpu.memory_space<vmem>>, vector<8x32xf32>
    tpu.vector_store %arg6[%c0_14, %c0_15], %26 {strides = array<i32>} : memref<8x32xf32, #tpu.memory_space<vmem>>, vector<8x32xf32>,
    %c0_16 = arith.constant 0 : index
    %c0_17 = arith.constant 0 : index
    %28 = vector.load %arg5[%c0_16, %c0_17] : memref<32x8xf32, #tpu.memory_space<vmem>>, vector<32x8xf32>
    %cst_18 = arith.constant dense<0.000000e+00> : vector<8x8xf32>
    %29 = tpu.matmul %26, %28, %cst_18 {dimension_numbers = #tpu.dot_dimension_numbers<[1], [0], [0], [1], [0, 0, 1, 1], [], []>} : vector<8x32xf32>, vector<32x8xf32>, vector<8x8xf32> -> vector<8x8xf32>
    %c0_19 = arith.constant 0 : index
    %c0_20 = arith.constant 0 : index
    %30 = vector.load %arg7[%c0_19, %c0_20] : memref<8x8xf32, #tpu.memory_space<vmem>>, vector<8x8xf32>
    tpu.vector_store %arg7[%c0_19, %c0_20], %29 {strides = array<i32>} : memref<8x8xf32, #tpu.memory_space<vmem>>, vector<8x8xf32>,
    return
  }
  func.func @transform_0(%arg0: i32) -> (i32, i32) {
    %c0_i32 = arith.constant 0 : i32
    %c0_i32_0 = arith.constant 0 : i32
    return %arg0, %c0_i32 : i32, i32
  }
  func.func @transform_1(%arg0: i32) -> (i32, i32) {
    %c0_i32 = arith.constant 0 : i32
    %c0_i32_0 = arith.constant 0 : i32
    %c0_i32_1 = arith.constant 0 : i32
    return %c0_i32, %c0_i32_0 : i32, i32
  }
  func.func @transform_2(%arg0: i32) -> (i32, i32) {
    %c0_i32 = arith.constant 0 : i32
    %c0_i32_0 = arith.constant 0 : i32
    %c0_i32_1 = arith.constant 0 : i32
    return %c0_i32, %c0_i32_0 : i32, i32
  }
  func.func @transform_3(%arg0: i32) -> (i32, i32) {
    %c0_i32 = arith.constant 0 : i32
    %c0_i32_0 = arith.constant 0 : i32
    %c0_i32_1 = arith.constant 0 : i32
    return %c0_i32, %c0_i32_0 : i32, i32
  }
  func.func @transform_4(%arg0: i32) -> (i32, i32) {
    %c0_i32 = arith.constant 0 : i32
    %c0_i32_0 = arith.constant 0 : i32
    %c0_i32_1 = arith.constant 0 : i32
    return %c0_i32, %c0_i32_0 : i32, i32
  }
  func.func @transform_5(%arg0: i32) -> (i32, i32) {
    %c0_i32 = arith.constant 0 : i32
    %c0_i32_0 = arith.constant 0 : i32
    return %arg0, %c0_i32 : i32, i32
  }
  func.func @transform_6(%arg0: i32) -> (i32, i32) {
    %c0_i32 = arith.constant 0 : i32
    %c0_i32_0 = arith.constant 0 : i32
    return %arg0, %c0_i32 : i32, i32
  }
}

</mosaic_0001>

<llo_original>
// kernel: tpu_custom_call.1
$region0: #{tpu_custom_call.1}
  #allocation0 [shape = 'u32[]', space=smem, size = 0x4, offset = 0x4, fixed_abs, tag = 'smem constant byte address 0x4 - core index']
  #allocation1 [shape = 'u32[72,128]{1,0:T(1,128)}', space=vmem, size = 0x9000, scoped, tag = 'internal scratch']
  %s0 = inlined_call_operand.vmem [shape: f32[8,32], index: 0, kind: input, shape index: {}]
  %s1 = inlined_call_operand.vmem [shape: f32[32,28], index: 1, kind: input, shape index: {}]
  %s2 = inlined_call_operand.hbm [shape: f32[28,32], index: 2, kind: input, shape index: {}]
  %s3 = inlined_call_operand.hbm [shape: f32[28,32], index: 3, kind: input, shape index: {}]
  %s4 = inlined_call_operand.vmem [shape: f32[32,8], index: 4, kind: input, shape index: {}]
  %s5 = inlined_call_operand.hbm [shape: f32[8,32], index: 5, kind: output, shape index: {0}]
  %s6 = inlined_call_operand.hbm [shape: f32[8,8], index: 6, kind: output, shape index: {1}]
  %7 = xla_tuple %s5, %s6
  %s8 = sld [smem:[#allocation0]]
  $region46: #{tpu_custom_call.1} parent=0
    _
  %s10 = ssub.s32 1, %s8
  %s11 = scalar_select 0, %s10, %s8
  $region1: #{tpu_custom_call.1} parent=0
    #allocation2 [shape = 'u8[16384]{0}', space=vmem, size = 0x4000, scoped, tag = 'input window, operand 2, single buffered']
    #allocation3 [shape = 's32[1]{0}', space=sflag, size = 0x4, scoped, tag = 'scoped memory for tpu_custom_call.1']
    #allocation4 [shape = 's32[1]{0}', space=sflag, size = 0x4, scoped, tag = 'scoped memory for tpu_custom_call.1']
    #allocation5 [shape = 'u8[16384]{0}', space=vmem, size = 0x4000, scoped, tag = 'input window, operand 3, single buffered']
    #allocation6 [shape = 's32[1]{0}', space=sflag, size = 0x4, scoped, tag = 'scoped memory for tpu_custom_call.1']
    #allocation7 [shape = 'u8[4096]{0}', space=vmem, size = 0x1000, scoped, tag = 'output window, operand 0, single buffered']
    #allocation8 [shape = 'u8[4096]{0}', space=vmem, size = 0x1000, scoped, tag = 'output window, operand 1, single buffered']
    #allocation9 [shape = 's32[1]{0}', space=sflag, size = 0x4, scoped, tag = 'scoped memory for tpu_custom_call.1']
    %12 = vsyncpa [#allocation3], 0
    %13 = vsyncpa [#allocation6], 0
    %14 = vsyncpa [#allocation4], 0
    %15 = vsyncpa [#allocation9], 0
    // Predicated region
    $region2: #{tpu_custom_call.1} parent=1 // pred_check
      _
    $region3: #{tpu_custom_call.1} parent=1 // pred_check_branch
      %17 = sbr.rel (0) target = $region5
    $region4: #{tpu_custom_call.1} parent=1 // pred_region
      _
    $region5: #{tpu_custom_call.1} parent=1 // pred_fallthru
      _
    // Predicated region
    $region6: #{tpu_custom_call.1} parent=1 // pred_check
      _
    $region7: #{tpu_custom_call.1} parent=1 // pred_check_branch
      %19 = sbr.rel (0) target = $region9
    $region8: #{tpu_custom_call.1} parent=1 // pred_region
      _
    $region9: #{tpu_custom_call.1} parent=1 // pred_fallthru
      _
    // Predicated region
    $region10: #{tpu_custom_call.1} parent=1 // pred_check
      _
    $region11: #{tpu_custom_call.1} parent=1 // pred_check_branch
      %21 = sbr.rel (0) target = $region13
    $region12: #{tpu_custom_call.1} parent=1 // pred_region
      %23 = vsyncadd [#allocation3], 0
      %s24 = sshll.u32 %s2, 4
      %s25 = int_to_ptr.hbm [resolvable:$true] %s24
      %s26 = sshll.u32 [#allocation2], 4
      %s27 = int_to_ptr.vmem [resolvable:$true] %s26
      %32 = dma.hbm_to_vmem [thread:$0]  %s25, 512, %s27, [#allocation3], 128, 128, 8
    $region13: #{tpu_custom_call.1} parent=1 // pred_fallthru
      _
    // Predicated region
    $region14: #{tpu_custom_call.1} parent=1 // pred_check
      _
    $region15: #{tpu_custom_call.1} parent=1 // pred_check_branch
      %34 = sbr.rel (0) target = $region17
    $region16: #{tpu_custom_call.1} parent=1 // pred_region
      %36 = vsyncadd [#allocation6], 0
      %s37 = sshll.u32 %s3, 4
      %s38 = int_to_ptr.hbm [resolvable:$true] %s37
      %s39 = sshll.u32 [#allocation5], 4
      %s40 = int_to_ptr.vmem [resolvable:$true] %s39
      %45 = dma.hbm_to_vmem [thread:$0]  %s38, 512, %s40, [#allocation6], 128, 128, 8
    $region17: #{tpu_custom_call.1} parent=1 // pred_fallthru
      _
    // Predicated region
    $region18: #{tpu_custom_call.1} parent=1 // pred_check
      _
    $region19: #{tpu_custom_call.1} parent=1 // pred_check_branch
      %47 = sbr.rel (0) target = $region21
    $region20: #{tpu_custom_call.1} parent=1 // pred_region
      _
    $region21: #{tpu_custom_call.1} parent=1 // pred_fallthru
      _
    // Predicated region
    $region22: #{tpu_custom_call.1} parent=1 // pred_check
      _
    $region23: #{tpu_custom_call.1} parent=1 // pred_check_branch
      %49 = sbr.rel (0) target = $region25
    $region24: #{tpu_custom_call.1} parent=1 // pred_region
      %51 = dma.done [#allocation3], 512
    $region25: #{tpu_custom_call.1} parent=1 // pred_fallthru
      _
    // Predicated region
    $region26: #{tpu_custom_call.1} parent=1 // pred_check
      _
    $region27: #{tpu_custom_call.1} parent=1 // pred_check_branch
      %53 = sbr.rel (0) target = $region29
    $region28: #{tpu_custom_call.1} parent=1 // pred_region
      %55 = dma.done [#allocation6], 512
    $region29: #{tpu_custom_call.1} parent=1 // pred_fallthru
      _
    %v56 = vld [vmem:[%s0] sm:$0xff]
    %v57 = vld [vmem:[%s1] sm:$0xff]
    %v58 = vld [vmem:[%s1 + $0x8] sm:$0xff]
    %v59 = vld [vmem:[%s1 + $0x10] sm:$0xff]
    %v60 = vld [vmem:[%s1 + $0x18] sm:$0xff]
    %vm61 = vcmask 261120
    %v63 = vsel %vm61, %v56, 0
    %65 = vmatpush.msra.mxu0 0.0
    %66 = vmatpush.msra.mxu0 0.0
    %67 = vmatpush.msra.mxu0 0.0
    %68 = vmatpush.msra.mxu0 0.0
    %69 = vmatpush.msra.mxu0 0.0
    %70 = vmatpush.msra.mxu0 0.0
    %71 = vmatpush.msra.mxu0 0.0
    %72 = vmatpush.msra.mxu0 0.0
    %73 = vmatpush.msra.mxu0 0.0
    %74 = vmatpush.msra.mxu0 0.0
    %75 = vmatpush.msra.mxu0 0.0
    %76 = vmatpush.msra.mxu0 0.0
    %77 = vmatpush.msra.mxu0 %v60
    %78 = vmatpush.msra.mxu0 %v59
    %79 = vmatpush.msra.mxu0 %v58
    %80 = vmatpush.msra.mxu0 %v57
    %81 = vmatmul.f32.gmra.mxu0 %v63
    %v82 = vpop.f32.mrf.mxu0
    %v83 = vadd.f32 0.0, %v82
    %84 = vdwg.mxu0
    %v85 = vmin.f32 %v83, 0.0
    %v86 = vand.u32 2147483647, %v83
    %v87 = vsub.f32 0.0, %v86
    %v88 = vmul.f32 %v87, 1.442695
    %v89 = vpow.pop %v88
    %v90 = vadd.f32 %v89, 1.0
    %v91 = vlog2.pop %v90
    %v92 = vmul.f32 %v91, 0.6931472
    %v93 = vmul.f32 -0.5, %v89
    %v94 = vadd.f32 %v93, 1.0
    %v95 = vmul.f32 %v94, %v89
    %v96 = vand.u32 2147483647, %v89
    %vm97 = vcmp.lt.f32.partialorder %v96, 0.0004427343
    %v98 = vsel %vm97, %v95, %v92
    %v99 = vsub.f32 %v85, %v98
    %v100 = vld [vmem:[#allocation2] sm:$0xff]
    %v101 = vld [vmem:[#allocation2 + $0x8] sm:$0xff]
    %v102 = vld [vmem:[#allocation2 + $0x10] sm:$0xff]
    %v103 = vld [vmem:[#allocation2 + $0x18] sm:$0xf]
    %v104 = vsub.f32 0.0, %v83
    %v105 = vmin.f32 %v104, 0.0
    %v106 = vand.u32 2147483647, %v104
    %v107 = vsub.f32 0.0, %v106
    %v108 = vmul.f32 %v107, 1.442695
    %v109 = vpow.pop %v108
    %v110 = vadd.f32 %v109, 1.0
    %v111 = vlog2.pop %v110
    %v112 = vmul.f32 %v111, 0.6931472
    %v113 = vmul.f32 -0.5, %v109
    %v114 = vadd.f32 %v113, 1.0
    %v115 = vmul.f32 %v114, %v109
    %v116 = vand.u32 2147483647, %v109
    %vm117 = vcmp.lt.f32.partialorder %v116, 0.0004427343
    %v118 = vsel %vm117, %v115, %v112
    %v119 = vsub.f32 %v105, %v118
    %v120 = vld [vmem:[#allocation5] sm:$0xff]
    %v121 = vld [vmem:[#allocation5 + $0x8] sm:$0xff]
    %v122 = vld [vmem:[#allocation5 + $0x10] sm:$0xff]
    %v123 = vld [vmem:[#allocation5 + $0x18] sm:$0xf]
    %vm124 = vcmask 228352
    %v126 = vsel %vm124, %v119, 0
    %vm128 = vcmask 1043456
    %v130 = vsel %vm128, %v123, 0
    %132 = vmatpush.msra.mxu0 0.0
    %133 = vmatpush.msra.mxu0 0.0
    %134 = vmatpush.msra.mxu0 0.0
    %135 = vmatpush.msra.mxu0 0.0
    %136 = vmatpush.msra.mxu0 0.0
    %137 = vmatpush.msra.mxu0 0.0
    %138 = vmatpush.msra.mxu0 0.0
    %139 = vmatpush.msra.mxu0 0.0
    %140 = vmatpush.msra.mxu0 0.0
    %141 = vmatpush.msra.mxu0 0.0
    %142 = vmatpush.msra.mxu0 0.0
    %143 = vmatpush.msra.mxu0 0.0
    %144 = vmatpush.msra.mxu0 %v130
    %145 = vmatpush.msra.mxu0 %v122
    %146 = vmatpush.msra.mxu0 %v121
    %147 = vmatpush.msra.mxu0 %v120
    %148 = vmatmul.f32.gmra.mxu0 %v126
    %v149 = vpop.f32.mrf.mxu0
    %v150 = vadd.f32 0.0, %v149
    %151 = vdwg.mxu0
    %v153 = vsel %vm124, %v99, 0
    %v156 = vsel %vm128, %v103, 0
    %158 = vmatpush.msra.mxu0 0.0
    %159 = vmatpush.msra.mxu0 0.0
    %160 = vmatpush.msra.mxu0 0.0
    %161 = vmatpush.msra.mxu0 0.0
    %162 = vmatpush.msra.mxu0 0.0
    %163 = vmatpush.msra.mxu0 0.0
    %164 = vmatpush.msra.mxu0 0.0
    %165 = vmatpush.msra.mxu0 0.0
    %166 = vmatpush.msra.mxu0 0.0
    %167 = vmatpush.msra.mxu0 0.0
    %168 = vmatpush.msra.mxu0 0.0
    %169 = vmatpush.msra.mxu0 0.0
    %170 = vmatpush.msra.mxu0 %v156
    %171 = vmatpush.msra.mxu0 %v102
    %172 = vmatpush.msra.mxu0 %v101
    %173 = vmatpush.msra.mxu0 %v100
    %174 = vmatmul.f32.gmra.mxu0 %v153
    %v175 = vpop.f32.mrf.mxu0
    %v176 = vadd.f32 %v150, %v175
    %177 = vdwg.mxu0
    %v178 = vmul.f32 %v176, 1.442695
    %v179 = vpow.pop %v178
    %180 = vst.msk [vmem:[#allocation7] sm:$0xff] %vm61, %v179
    %v181 = vld [vmem:[%s4] sm:$0xff]
    %v182 = vld [vmem:[%s4 + $0x8] sm:$0xff]
    %v183 = vld [vmem:[%s4 + $0x10] sm:$0xff]
    %v184 = vld [vmem:[%s4 + $0x18] sm:$0xff]
    %v186 = vsel %vm61, %v179, 0
    %188 = vmatpush.msra.mxu0 0.0
    %189 = vmatpush.msra.mxu0 0.0
    %190 = vmatpush.msra.mxu0 0.0
    %191 = vmatpush.msra.mxu0 0.0
    %192 = vmatpush.msra.mxu0 0.0
    %193 = vmatpush.msra.mxu0 0.0
    %194 = vmatpush.msra.mxu0 0.0
    %195 = vmatpush.msra.mxu0 0.0
    %196 = vmatpush.msra.mxu0 0.0
    %197 = vmatpush.msra.mxu0 0.0
    %198 = vmatpush.msra.mxu0 0.0
    %199 = vmatpush.msra.mxu0 0.0
    %200 = vmatpush.msra.mxu0 %v184
    %201 = vmatpush.msra.mxu0 %v183
    %202 = vmatpush.msra.mxu0 %v182
    %203 = vmatpush.msra.mxu0 %v181
    %204 = vmatmul.f32.gmra.mxu0 %v186
    %v205 = vpop.f32.mrf.mxu0
    %v206 = vadd.f32 0.0, %v205
    %207 = vdwg.mxu0
    %vm208 = vcmask 64512
    %209 = vst.msk [vmem:[#allocation8] sm:$0xff] %vm208, %v206
    // Predicated region
    $region30: #{tpu_custom_call.1} parent=1 // pred_check
      _
    $region31: #{tpu_custom_call.1} parent=1 // pred_check_branch
      %211 = sbr.rel (0) target = $region33
    $region32: #{tpu_custom_call.1} parent=1 // pred_region
      %213 = vsyncadd [#allocation4], 0
      %s215 = sshll.u32 [#allocation7], 4
      %s216 = int_to_ptr.vmem [resolvable:$true] %s215
      %s217 = sshll.u32 %s5, 4
      %s218 = int_to_ptr.hbm [resolvable:$true] %s217
      %220 = dma.vmem_to_hbm [thread:$0]  %s216, 128, %s218, [#allocation4]
    $region33: #{tpu_custom_call.1} parent=1 // pred_fallthru
      _
    // Predicated region
    $region34: #{tpu_custom_call.1} parent=1 // pred_check
      _
    $region35: #{tpu_custom_call.1} parent=1 // pred_check_branch
      %222 = sbr.rel (0) target = $region37
    $region36: #{tpu_custom_call.1} parent=1 // pred_region
      %224 = vsyncadd [#allocation9], 0
      %s226 = sshll.u32 [#allocation8], 4
      %s227 = int_to_ptr.vmem [resolvable:$true] %s226
      %s228 = sshll.u32 %s6, 4
      %s229 = int_to_ptr.hbm [resolvable:$true] %s228
      %231 = dma.vmem_to_hbm [thread:$0]  %s227, 128, %s229, [#allocation9]
    $region37: #{tpu_custom_call.1} parent=1 // pred_fallthru
      _
    // Predicated region
    $region38: #{tpu_custom_call.1} parent=1 // pred_check
      _
    $region39: #{tpu_custom_call.1} parent=1 // pred_check_branch
      %233 = sbr.rel (0) target = $region41
    $region40: #{tpu_custom_call.1} parent=1 // pred_region
      %235 = dma.done [#allocation4], 128
    $region41: #{tpu_custom_call.1} parent=1 // pred_fallthru
      _
    // Predicated region
    $region42: #{tpu_custom_call.1} parent=1 // pred_check
      _
    $region43: #{tpu_custom_call.1} parent=1 // pred_check_branch
      %237 = sbr.rel (0) target = $region45
    $region44: #{tpu_custom_call.1} parent=1 // pred_region
      %239 = dma.done [#allocation9], 128
    $region45: #{tpu_custom_call.1} parent=1 // pred_fallthru
      _
    %240 = vsyncpa [#allocation3], 1
    %241 = vsyncpa [#allocation6], 1
    %242 = vsyncpa [#allocation4], 1
    %243 = vsyncpa [#allocation9], 1

</llo_original>
